<compile_context>
chip_gen: v7x
topology: tpu7x:2x2x1
jax: 0.10.0
libtpu: 0.0.40
codegen_flags: <defaults>
</compile_context>

<pallas_src>
import functools
import math

import jax
import jax.numpy as jnp
from jax.experimental import pallas as pl
from jax.experimental.pallas import tpu as pltpu


def _round_up(x: int, m: int) -> int:
    return ((x + m - 1) // m) * m


# ---------------- trace-time weight re-layout (tiny, one-time) ---------------- #

def _rope_perm_cols(w):
    """Permute last axis into RoPE_reshape order: [even lanes | odd lanes]."""
    d = w.shape[-1]
    perm = jnp.concatenate([jnp.arange(0, d, 2), jnp.arange(1, d, 2)])
    return jnp.take(w, perm, axis=-1)


def _rope_rotate_cols(w):
    """Columns such that x @ rot(w) == RoPE_rotate(x @ w)."""
    half = w.shape[-1] // 2
    return jnp.concatenate([-w[..., half:], w[..., :half]], axis=-1)


# ----------------------- fused query projection kernel ------------------------ #
# q_down -> RMSNorm -> q_up(nope / rope / rotated-rope) -> RoPE   in one kernel.

def _q_proj_kernel(x_ref, wd_ref, g_ref, wn_ref, wr_ref, wrr_ref, cos_ref, sin_ref,
                   qn_ref, qr_ref, acc_ref, *, eps, head_num):
    k = pl.program_id(1)

    @pl.when(k == 0)
    def _():
        acc_ref[...] = jnp.zeros_like(acc_ref)

    acc_ref[...] += jnp.dot(x_ref[...], wd_ref[...],
                            preferred_element_type=jnp.float32)

    @pl.when(k == pl.num_programs(1) - 1)
    def _():
        h = acc_ref[...]
        var = jnp.mean(h * h, axis=-1, keepdims=True)
        hn = h * jax.lax.rsqrt(var + eps) * g_ref[...]
        qn_ref[...] = jnp.dot(hn, wn_ref[...],
                              preferred_element_type=jnp.float32).astype(qn_ref.dtype)
        r = jnp.dot(hn, wr_ref[...], preferred_element_type=jnp.float32)
        rr = jnp.dot(hn, wrr_ref[...], preferred_element_type=jnp.float32)
        # cos/sin are identical for every head -> tile along lanes in-register.
        cos_t = jnp.concatenate([cos_ref[...]] * head_num, axis=-1)
        sin_t = jnp.concatenate([sin_ref[...]] * head_num, axis=-1)
        qr_ref[...] = (r * cos_t + rr * sin_t).astype(qr_ref.dtype)


def q_proj_fused(x2d, w_down, gamma, w_up_nope, w_up_rope, w_up_rope_rot,
                 cos_r, sin_r, *, head_num, eps=1e-7, tm=256, tk=512):
    R, d = x2d.shape
    dc = w_down.shape[1]
    n_nope, n_rope = w_up_nope.shape[1], w_up_rope.shape[1]
    d_rope = cos_r.shape[1]
    tm = min(tm, _round_up(R, 8))
    tk = min(tk, d)
    Rp, Kp = _round_up(R, tm), _round_up(d, tk)
    if Rp != R:
        x2d = jnp.pad(x2d, ((0, Rp - R), (0, 0)))
        cos_r = jnp.pad(cos_r, ((0, Rp - R), (0, 0)))
        sin_r = jnp.pad(sin_r, ((0, Rp - R), (0, 0)))
    if Kp != d:
        x2d = jnp.pad(x2d, ((0, 0), (0, Kp - d)))
        w_down = jnp.pad(w_down, ((0, Kp - d), (0, 0)))

    qn, qr = pl.pallas_call(
        functools.partial(_q_proj_kernel, eps=eps, head_num=head_num),
        out_shape=(jax.ShapeDtypeStruct((Rp, n_nope), x2d.dtype),
                   jax.ShapeDtypeStruct((Rp, n_rope), x2d.dtype)),
        grid=(Rp // tm, Kp // tk),
        in_specs=[
            pl.BlockSpec((tm, tk), lambda i, k: (i, k)),
            pl.BlockSpec((tk, dc), lambda i, k: (k, 0)),
            pl.BlockSpec((1, dc), lambda i, k: (0, 0)),
            pl.BlockSpec((dc, n_nope), lambda i, k: (0, 0)),
            pl.BlockSpec((dc, n_rope), lambda i, k: (0, 0)),
            pl.BlockSpec((dc, n_rope), lambda i, k: (0, 0)),
            pl.BlockSpec((tm, d_rope), lambda i, k: (i, 0)),
            pl.BlockSpec((tm, d_rope), lambda i, k: (i, 0)),
        ],
        out_specs=(pl.BlockSpec((tm, n_nope), lambda i, k: (i, 0)),
                   pl.BlockSpec((tm, n_rope), lambda i, k: (i, 0))),
        scratch_shapes=[pltpu.VMEM((tm, dc), jnp.float32)],
        compiler_params=pltpu.CompilerParams(
            dimension_semantics=("parallel", "arbitrary")),
    )(x2d, w_down, gamma.reshape(1, dc), w_up_nope, w_up_rope, w_up_rope_rot,
      cos_r, sin_r)
    if Rp != R:
        qn, qr = qn[:R], qr[:R]
    return qn, qr


# ------------------------- fused kv projection kernel ------------------------- #
# kv_down (split into c_kv / k_rope via split weights) -> RMSNorm ->
# kv_up(k_nope / value) + RoPE on k_rope   in one kernel.

def _kv_proj_kernel(x_ref, wdc_ref, wdr_ref, g_ref, wun_ref, wuv_ref,
                    cos_ref, sin_ref, kn_ref, kr_ref, v_ref,
                    acc_c, acc_r, *, eps):
    k = pl.program_id(1)

    @pl.when(k == 0)
    def _():
        acc_c[...] = jnp.zeros_like(acc_c)
        acc_r[...] = jnp.zeros_like(acc_r)

    x = x_ref[...]
    acc_c[...] += jnp.dot(x, wdc_ref[...], preferred_element_type=jnp.float32)
    acc_r[...] += jnp.dot(x, wdr_ref[...], preferred_element_type=jnp.float32)

    @pl.when(k == pl.num_programs(1) - 1)
    def _():
        c = acc_c[...]
        var = jnp.mean(c * c, axis=-1, keepdims=True)
        cn = c * jax.lax.rsqrt(var + eps) * g_ref[...]
        kn_ref[...] = jnp.dot(cn, wun_ref[...],
                              preferred_element_type=jnp.float32).astype(kn_ref.dtype)
        v_ref[...] = jnp.dot(cn, wuv_ref[...],
                             preferred_element_type=jnp.float32).astype(v_ref.dtype)
        r = acc_r[...]                                  # already rope_reshape-ordered
        half = r.shape[-1] // 2
        r_rot = jnp.concatenate([-r[:, half:], r[:, :half]], axis=-1)
        kr_ref[...] = (r * cos_ref[...] + r_rot * sin_ref[...]).astype(kr_ref.dtype)


def kv_proj_fused(x2d, w_down_c, w_down_r, gamma, w_up_nope, w_up_v,
                  cos_r, sin_r, *, eps=1e-7, tm=256, tk=512):
    R, d = x2d.shape
    dc_kv = w_down_c.shape[1]
    d_rope = w_down_r.shape[1]
    n_nope, n_v = w_up_nope.shape[1], w_up_v.shape[1]
    tm = min(tm, _round_up(R, 8))
    tk = min(tk, d)
    Rp, Kp = _round_up(R, tm), _round_up(d, tk)
    if Rp != R:
        x2d = jnp.pad(x2d, ((0, Rp - R), (0, 0)))
        cos_r = jnp.pad(cos_r, ((0, Rp - R), (0, 0)))
        sin_r = jnp.pad(sin_r, ((0, Rp - R), (0, 0)))
    if Kp != d:
        x2d = jnp.pad(x2d, ((0, 0), (0, Kp - d)))
        w_down_c = jnp.pad(w_down_c, ((0, Kp - d), (0, 0)))
        w_down_r = jnp.pad(w_down_r, ((0, Kp - d), (0, 0)))

    kn, kr, v = pl.pallas_call(
        functools.partial(_kv_proj_kernel, eps=eps),
        out_shape=(jax.ShapeDtypeStruct((Rp, n_nope), x2d.dtype),
                   jax.ShapeDtypeStruct((Rp, d_rope), x2d.dtype),
                   jax.ShapeDtypeStruct((Rp, n_v), x2d.dtype)),
        grid=(Rp // tm, Kp // tk),
        in_specs=[
            pl.BlockSpec((tm, tk), lambda i, k: (i, k)),
            pl.BlockSpec((tk, dc_kv), lambda i, k: (k, 0)),
            pl.BlockSpec((tk, d_rope), lambda i, k: (k, 0)),
            pl.BlockSpec((1, dc_kv), lambda i, k: (0, 0)),
            pl.BlockSpec((dc_kv, n_nope), lambda i, k: (0, 0)),
            pl.BlockSpec((dc_kv, n_v), lambda i, k: (0, 0)),
            pl.BlockSpec((tm, d_rope), lambda i, k: (i, 0)),
            pl.BlockSpec((tm, d_rope), lambda i, k: (i, 0)),
        ],
        out_specs=(pl.BlockSpec((tm, n_nope), lambda i, k: (i, 0)),
                   pl.BlockSpec((tm, d_rope), lambda i, k: (i, 0)),
                   pl.BlockSpec((tm, n_v), lambda i, k: (i, 0))),
        scratch_shapes=[pltpu.VMEM((tm, dc_kv), jnp.float32),
                        pltpu.VMEM((tm, d_rope), jnp.float32)],
        compiler_params=pltpu.CompilerParams(
            dimension_semantics=("parallel", "arbitrary")),
    )(x2d, w_down_c, w_down_r, gamma.reshape(1, dc_kv), w_up_nope, w_up_v,
      cos_r, sin_r)
    if Rp != R:
        kn, kr, v = kn[:R], kr[:R], v[:R]
    return kn, kr, v


# ---------------------- fused attention + out_proj kernel --------------------- #

def _attn_kernel(qn_ref, qr_ref, kn_ref, kr_ref, v_ref, wo_ref, o_ref, *,
                 scale, head_num, d_pre_head, d_rope, dc_v):
    qn = qn_ref[0]                  # [Tq, H*d_pre_head]
    qr = qr_ref[0]                  # [Tq, H*d_rope]
    kn = kn_ref[0]                  # [Tk, H*d_pre_head]
    kr = kr_ref[0]                  # [Tk, d_rope]   (shared across heads)
    v = v_ref[0]                    # [Tk, H*dc_v]
    dims = (((1,), (1,)), ((), ()))
    outs = []
    for h in range(head_num):       # static unroll; H is small
        qn_h = qn[:, h * d_pre_head:(h + 1) * d_pre_head]
        qr_h = qr[:, h * d_rope:(h + 1) * d_rope]
        kn_h = kn[:, h * d_pre_head:(h + 1) * d_pre_head]
        v_h = v[:, h * dc_v:(h + 1) * dc_v]
        s = (jax.lax.dot_general(qn_h, kn_h, dims, preferred_element_type=jnp.float32)
             + jax.lax.dot_general(qr_h, kr, dims, preferred_element_type=jnp.float32))
        s = s * scale
        m = jnp.max(s, axis=-1, keepdims=True)
        p = jnp.exp(s - m)
        l = jnp.sum(p, axis=-1, keepdims=True)
        o_h = jnp.dot(p, v_h, preferred_element_type=jnp.float32) \
            * pl.reciprocal(l, approx=True)
        outs.append(o_h)
    attn = jnp.concatenate(outs, axis=-1)               # lane-dense [Tq, H*dc_v]
    o_ref[0] = jnp.dot(attn, wo_ref[...],
                       preferred_element_type=jnp.float32).astype(o_ref.dtype)


def attention_fused(q_nope, q_rope, k_nope, k_rope, value, w_out, *,
                    head_num, d_pre_head, d_rope, dc_v, scale):
    B, Tq, _ = q_nope.shape
    _, Tk, _ = k_nope.shape
    d_out = w_out.shape[1]
    return pl.pallas_call(
        functools.partial(_attn_kernel, scale=scale, head_num=head_num,
                          d_pre_head=d_pre_head, d_rope=d_rope, dc_v=dc_v),
        out_shape=jax.ShapeDtypeStruct((B, Tq, d_out), q_nope.dtype),
        grid=(B,),
        in_specs=[
            pl.BlockSpec((1, Tq, head_num * d_pre_head), lambda b: (b, 0, 0)),
            pl.BlockSpec((1, Tq, head_num * d_rope), lambda b: (b, 0, 0)),
            pl.BlockSpec((1, Tk, head_num * d_pre_head), lambda b: (b, 0, 0)),
            pl.BlockSpec((1, Tk, d_rope), lambda b: (b, 0, 0)),
            pl.BlockSpec((1, Tk, head_num * dc_v), lambda b: (b, 0, 0)),
            pl.BlockSpec((head_num * dc_v, d_out), lambda b: (0, 0)),
        ],
        out_specs=pl.BlockSpec((1, Tq, d_out), lambda b: (b, 0, 0)),
        compiler_params=pltpu.CompilerParams(dimension_semantics=("parallel",)),
    )(q_nope, q_rope, k_nope, k_rope, value, w_out)


# ------------------------------ CrossMLA forward ------------------------------ #

def build_rope_cache(d_rope, max_len=8192):
    inv_freq = 1.0 / (10000.0 ** (jnp.arange(0, d_rope, 2, dtype=jnp.float32) / d_rope))
    t = jnp.arange(max_len, dtype=jnp.float32)
    freqs = jnp.outer(t, inv_freq)
    emb = jnp.concatenate([freqs, freqs], axis=-1)
    return jnp.cos(emb), jnp.sin(emb)


def cross_mla_forward(params, q_inputs, kv_input, q_pos_ids, kv_pos_ids,
                      *, d_pre_head, head_num):
    B, Tq, d = q_inputs.shape
    _, Tk, _ = kv_input.shape
    H = head_num
    d_rope = d_pre_head // 2
    dc_v = d_pre_head
    dc_kv = d_pre_head // 8
    q_head_dim = d_pre_head + d_rope
    meg_d = d_pre_head + dc_v
    dc_q = params["q_down"].shape[1]

    # -- trace-time weight re-layout: fold rope_reshape / rotate / head splits
    #    into weight column order (tiny one-time ops on weights, no runtime cost)
    w_qu = params["q_up"].reshape(dc_q, H, q_head_dim)
    w_qu_nope = w_qu[:, :, :d_pre_head].reshape(dc_q, H * d_pre_head)
    w_qu_rope_h = _rope_perm_cols(w_qu[:, :, d_pre_head:])
    w_qu_rope = w_qu_rope_h.reshape(dc_q, H * d_rope)
    w_qu_rope_rot = _rope_rotate_cols(w_qu_rope_h).reshape(dc_q, H * d_rope)

    w_kvd = params["kv_down"]
    w_kvd_c = w_kvd[:, :dc_kv]
    w_kvd_r = _rope_perm_cols(w_kvd[:, dc_kv:])
    w_kvu = params["kv_up"].reshape(dc_kv, H, meg_d)
    w_kvu_nope = w_kvu[:, :, :d_pre_head].reshape(dc_kv, H * d_pre_head)
    w_kvu_v = w_kvu[:, :, d_pre_head:].reshape(dc_kv, H * dc_v)

    # -- cos/sin gather at position ids (JAX glue: layout plumbing, not compute)
    cos, sin = params["rope_cos"], params["rope_sin"]
    q_cos = cos[q_pos_ids].reshape(B * Tq, d_rope)
    q_sin = sin[q_pos_ids].reshape(B * Tq, d_rope)
    k_cos = cos[kv_pos_ids].reshape(B * Tk, d_rope)
    k_sin = sin[kv_pos_ids].reshape(B * Tk, d_rope)

    # -- fused projections (1 pallas_call each)
    q_nope, q_rope = q_proj_fused(
        q_inputs.reshape(B * Tq, d), params["q_down"], params["q_down_norm_w"],
        w_qu_nope, w_qu_rope, w_qu_rope_rot, q_cos, q_sin, head_num=H)
    k_nope, k_rope, value = kv_proj_fused(
        kv_input.reshape(B * Tk, d), w_kvd_c, w_kvd_r, params["kv_norm_w"],
        w_kvu_nope, w_kvu_v, k_cos, k_sin)

    # -- fused attention + out_proj (1 pallas_call)
    scale = 1.0 / math.sqrt(q_head_dim)
    out = attention_fused(
        q_nope.reshape(B, Tq, H * d_pre_head),
        q_rope.reshape(B, Tq, H * d_rope),
        k_nope.reshape(B, Tk, H * d_pre_head),
        k_rope.reshape(B, Tk, d_rope),
        value.reshape(B, Tk, H * dc_v),
        params["out_proj"],
        head_num=H, d_pre_head=d_pre_head, d_rope=d_rope, dc_v=dc_v, scale=scale)
    return out


# ----------------------------- pure-JAX reference ------------------------------ #

def _ref_rms_norm(x, w, eps=1e-7):
    xf = x.astype(jnp.float32)
    var = jnp.mean(xf * xf, axis=-1, keepdims=True)
    return (w * (xf * jax.lax.rsqrt(var + eps))).astype(x.dtype)


def _ref_rope_reshape(x):
    *lead, D = x.shape
    return x.reshape(*lead, D // 2, 2).swapaxes(-1, -2).reshape(*lead, D)


def _ref_rotate(x):
    h = x.shape[-1] // 2
    return jnp.concatenate([-x[..., h:], x[..., :h]], axis=-1)


def cross_mla_reference(params, q_inputs, kv_input, q_pos_ids, kv_pos_ids,
                        *, d_pre_head, head_num):
    B, Tq, d = q_inputs.shape
    _, Tk, _ = kv_input.shape
    H = head_num
    d_rope = d_pre_head // 2
    dc_v = d_pre_head
    dc_kv = d_pre_head // 8
    q_head_dim = d_pre_head + d_rope
    meg_d = d_pre_head + dc_v
    lin = lambda x, w: jnp.einsum("...i,io->...o", x, w)

    q = lin(q_inputs, params["q_down"])
    q = _ref_rms_norm(q, params["q_down_norm_w"])
    q = lin(q, params["q_up"])
    q = q.reshape(B, Tq, H, q_head_dim).transpose(0, 2, 1, 3)
    q_nope, q_rope = q[..., :d_pre_head], q[..., d_pre_head:]

    ckv = lin(kv_input, params["kv_down"])
    c_kv, k_rope = ckv[..., :dc_kv], ckv[..., dc_kv:]
    c_kv = _ref_rms_norm(c_kv, params["kv_norm_w"])
    kv = lin(c_kv, params["kv_up"])
    kv = kv.reshape(B, Tk, H, meg_d).transpose(0, 2, 1, 3)
    k_nope, value = kv[..., :d_pre_head], kv[..., d_pre_head:]
    k_rope = k_rope.reshape(B, Tk, 1, d_rope).transpose(0, 2, 1, 3)

    cos, sin = params["rope_cos"], params["rope_sin"]
    q_cos, q_sin = cos[q_pos_ids][:, None], sin[q_pos_ids][:, None]
    k_cos, k_sin = cos[kv_pos_ids][:, None], sin[kv_pos_ids][:, None]
    qr, kr = _ref_rope_reshape(q_rope), _ref_rope_reshape(k_rope)
    q_emb = qr * q_cos + _ref_rotate(qr) * q_sin
    k_emb = kr * k_cos + _ref_rotate(kr) * k_sin

    query = jnp.concatenate([q_nope, q_emb], axis=-1)
    key = jnp.concatenate(
        [k_nope, jnp.broadcast_to(k_emb, (B, H, Tk, d_rope))], axis=-1)

    scale = 1.0 / math.sqrt(q_head_dim)
    s = jnp.einsum("bhqd,bhkd->bhqk", query, key) * scale
    p = jax.nn.softmax(s, axis=-1)
    attn = jnp.einsum("bhqk,bhkd->bhqd", p, value)
    attn = attn.transpose(0, 2, 1, 3).reshape(B, Tq, H * dc_v)
    return lin(attn, params["out_proj"])


# ------------------------------------ main ------------------------------------ #

if __name__ == "__main__":
    B, Tq, Tk = 2, 8, 16
    d, d_pre_head, head_num = 64, 32, 4
    d_rope = d_pre_head // 2          # 16
    dc_kv = d_pre_head // 8           # 4
    dc_q = d // 4                     # 16
    dc_v = d_pre_head                 # 32
    q_head_dim = d_pre_head + d_rope  # 48
    meg_d = d_pre_head + dc_v         # 64

    key = jax.random.PRNGKey(0)
    ks = jax.random.split(key, 11)
    w = lambda k, shape: 0.05 * jax.random.normal(k, shape, dtype=jnp.float32)
    cos, sin = build_rope_cache(d_rope, max_len=8192)
    params = {
        "q_down": w(ks[0], (d, dc_q)),
        "q_down_norm_w": 1.0 + 0.1 * jax.random.normal(ks[1], (dc_q,), dtype=jnp.float32),
        "q_up": w(ks[2], (dc_q, head_num * q_head_dim)),
        "kv_down": w(ks[3], (d, dc_kv + d_rope)),
        "kv_norm_w": 1.0 + 0.1 * jax.random.normal(ks[4], (dc_kv,), dtype=jnp.float32),
        "kv_up": w(ks[5], (dc_kv, head_num * meg_d)),
        "out_proj": w(ks[6], (head_num * dc_v, d)),
        "rope_cos": cos,
        "rope_sin": sin,
    }
    q_inputs = jax.random.normal(ks[7], (B, Tq, d), dtype=jnp.float32)
    kv_input = jax.random.normal(ks[8], (B, Tk, d), dtype=jnp.float32)
    q_pos_ids = jax.random.randint(ks[9], (B, Tq), 0, 512, dtype=jnp.int32)
    kv_pos_ids = jax.random.randint(ks[10], (B, Tk), 0, 512, dtype=jnp.int32)

    out = cross_mla_forward(params, q_inputs, kv_input, q_pos_ids, kv_pos_ids,
                            d_pre_head=d_pre_head, head_num=head_num)
    out = jax.block_until_ready(out)

    ref = cross_mla_reference(params, q_inputs, kv_input, q_pos_ids, kv_pos_ids,
                              d_pre_head=d_pre_head, head_num=head_num)
    ref = jax.block_until_ready(ref)

    assert out.shape == (B, Tq, d), out.shape
    max_err = float(jnp.max(jnp.abs(out - ref)))
    assert jnp.allclose(out, ref, atol=2e-3, rtol=2e-3), f"max |err| = {max_err}"
    print("KERNEL_OK")
</pallas_src>

<mosaic_0001>
module attributes {stable_mosaic.version = 11 : i64} {
  func.func @_q_proj_kernel(%arg0: i32, %arg1: i32, %arg2: memref<16x64xf32, #tpu.memory_space<vmem>>, %arg3: memref<64x16xf32, #tpu.memory_space<vmem>>, %arg4: memref<1x16xf32, #tpu.memory_space<vmem>>, %arg5: memref<16x128xf32, #tpu.memory_space<vmem>>, %arg6: memref<16x64xf32, #tpu.memory_space<vmem>>, %arg7: memref<16x64xf32, #tpu.memory_space<vmem>>, %arg8: memref<16x16xf32, #tpu.memory_space<vmem>>, %arg9: memref<16x16xf32, #tpu.memory_space<vmem>>, %arg10: memref<16x128xf32, #tpu.memory_space<vmem>>, %arg11: memref<16x64xf32, #tpu.memory_space<vmem>>, %arg12: memref<16x16xf32, #tpu.memory_space<vmem>>) attributes {dimension_semantics = [#tpu.dimension_semantics<parallel>, #tpu.dimension_semantics<arbitrary>], iteration_bounds = array<i64: 1, 1>, scalar_prefetch = 0 : i64, scratch_operands = 1 : i64, tpu.core_type = #tpu.core_type<tc>, window_params = [{transform_indices = @transform_0, window_bounds = array<i64: 16, 64>}, {transform_indices = @transform_1, window_bounds = array<i64: 64, 16>}, {pipeline_mode = #tpu.pipeline_mode<synchronous>, transform_indices = @transform_2, window_bounds = array<i64: 1, 16>}, {pipeline_mode = #tpu.pipeline_mode<synchronous>, transform_indices = @transform_3, window_bounds = array<i64: 16, 128>}, {pipeline_mode = #tpu.pipeline_mode<synchronous>, transform_indices = @transform_4, window_bounds = array<i64: 16, 64>}, {pipeline_mode = #tpu.pipeline_mode<synchronous>, transform_indices = @transform_5, window_bounds = array<i64: 16, 64>}, {transform_indices = @transform_6, window_bounds = array<i64: 16, 16>}, {transform_indices = @transform_7, window_bounds = array<i64: 16, 16>}, {transform_indices = @transform_8, window_bounds = array<i64: 16, 128>}, {transform_indices = @transform_9, window_bounds = array<i64: 16, 64>}]} {
    %c0_i32 = arith.constant 0 : i32
    %0 = arith.cmpi eq, %arg1, %c0_i32 : i32
    %1 = arith.extui %0 : i1 to i32
    %c0_i32_0 = arith.constant 0 : i32
    %2 = arith.cmpi ne, %1, %c0_i32_0 : i32
    scf.if %2 {
      %cst_10 = arith.constant 0.000000e+00 : f32
      %12 = vector.broadcast %cst_10 : f32 to vector<16x16xf32>
      %c0_11 = arith.constant 0 : index
      %c0_12 = arith.constant 0 : index
      %13 = vector.load %arg12[%c0_11, %c0_12] : memref<16x16xf32, #tpu.memory_space<vmem>>, vector<16x16xf32>
      tpu.vector_store %arg12[%c0_11, %c0_12], %12 {strides = array<i32>} : memref<16x16xf32, #tpu.memory_space<vmem>>, vector<16x16xf32>,
    } else {
    }
    %c0 = arith.constant 0 : index
    %c0_1 = arith.constant 0 : index
    %3 = vector.load %arg12[%c0, %c0_1] : memref<16x16xf32, #tpu.memory_space<vmem>>, vector<16x16xf32>
    %c0_2 = arith.constant 0 : index
    %c0_3 = arith.constant 0 : index
    %4 = vector.load %arg2[%c0_2, %c0_3] : memref<16x64xf32, #tpu.memory_space<vmem>>, vector<16x64xf32>
    %c0_4 = arith.constant 0 : index
    %c0_5 = arith.constant 0 : index
    %5 = vector.load %arg3[%c0_4, %c0_5] : memref<64x16xf32, #tpu.memory_space<vmem>>, vector<64x16xf32>
    %cst = arith.constant dense<0.000000e+00> : vector<16x16xf32>
    %6 = tpu.matmul %4, %5, %cst {dimension_numbers = #tpu.dot_dimension_numbers<[1], [0], [0], [1], [0, 0, 1, 1], [], []>} : vector<16x64xf32>, vector<64x16xf32>, vector<16x16xf32> -> vector<16x16xf32>
    %7 = arith.addf %3, %6 : vector<16x16xf32>
    %c0_6 = arith.constant 0 : index
    %c0_7 = arith.constant 0 : index
    %8 = vector.load %arg12[%c0_6, %c0_7] : memref<16x16xf32, #tpu.memory_space<vmem>>, vector<16x16xf32>
    tpu.vector_store %arg12[%c0_6, %c0_7], %7 {strides = array<i32>} : memref<16x16xf32, #tpu.memory_space<vmem>>, vector<16x16xf32>,
    %c0_i32_8 = arith.constant 0 : i32
    %9 = arith.cmpi eq, %arg1, %c0_i32_8 : i32
    %10 = arith.extui %9 : i1 to i32
    %c0_i32_9 = arith.constant 0 : i32
    %11 = arith.cmpi ne, %10, %c0_i32_9 : i32
    scf.if %11 {
      %c0_10 = arith.constant 0 : index
      %c0_11 = arith.constant 0 : index
      %12 = vector.load %arg12[%c0_10, %c0_11] : memref<16x16xf32, #tpu.memory_space<vmem>>, vector<16x16xf32>
      %13 = arith.mulf %12, %12 : vector<16x16xf32>
      %cst_12 = arith.constant dense<0.000000e+00> : vector<16xf32>
      %14 = vector.multi_reduction <add>, %13, %cst_12 [1] : vector<16x16xf32> to vector<16xf32>
      %15 = vector.shape_cast %14 : vector<16xf32> to vector<16x1xf32>
      %cst_13 = arith.constant 1.600000e+01 : f32
      %16 = vector.broadcast %cst_13 : f32 to vector<16x1xf32>
      %17 = arith.divf %15, %16 : vector<16x1xf32>
      %cst_14 = arith.constant 1.000000e-07 : f32
      %18 = vector.broadcast %cst_14 : f32 to vector<16x1xf32>
      %19 = arith.addf %17, %18 : vector<16x1xf32>
      %20 = math.rsqrt %19 : vector<16x1xf32>
      %21 = vector.broadcast %20 : vector<16x1xf32> to vector<16x16xf32>
      %22 = arith.mulf %12, %21 : vector<16x16xf32>
      %c0_15 = arith.constant 0 : index
      %c0_16 = arith.constant 0 : index
      %23 = vector.load %arg4[%c0_15, %c0_16] : memref<1x16xf32, #tpu.memory_space<vmem>>, vector<1x16xf32>
      %24 = vector.broadcast %23 : vector<1x16xf32> to vector<16x16xf32>
      %25 = arith.mulf %22, %24 : vector<16x16xf32>
      %c0_17 = arith.constant 0 : index
      %c0_18 = arith.constant 0 : index
      %26 = vector.load %arg5[%c0_17, %c0_18] : memref<16x128xf32, #tpu.memory_space<vmem>>, vector<16x128xf32>
      %cst_19 = arith.constant dense<0.000000e+00> : vector<16x128xf32>
      %27 = tpu.matmul %25, %26, %cst_19 {dimension_numbers = #tpu.dot_dimension_numbers<[1], [0], [0], [1], [0, 0, 1, 1], [], []>} : vector<16x16xf32>, vector<16x128xf32>, vector<16x128xf32> -> vector<16x128xf32>
      %c0_20 = arith.constant 0 : index
      %c0_21 = arith.constant 0 : index
      %28 = vector.load %arg10[%c0_20, %c0_21] : memref<16x128xf32, #tpu.memory_space<vmem>>, vector<16x128xf32>
      tpu.vector_store %arg10[%c0_20, %c0_21], %27 {strides = array<i32>} : memref<16x128xf32, #tpu.memory_space<vmem>>, vector<16x128xf32>,
      %c0_22 = arith.constant 0 : index
      %c0_23 = arith.constant 0 : index
      %29 = vector.load %arg6[%c0_22, %c0_23] : memref<16x64xf32, #tpu.memory_space<vmem>>, vector<16x64xf32>
      %cst_24 = arith.constant dense<0.000000e+00> : vector<16x64xf32>
      %30 = tpu.matmul %25, %29, %cst_24 {dimension_numbers = #tpu.dot_dimension_numbers<[1], [0], [0], [1], [0, 0, 1, 1], [], []>} : vector<16x16xf32>, vector<16x64xf32>, vector<16x64xf32> -> vector<16x64xf32>
      %c0_25 = arith.constant 0 : index
      %c0_26 = arith.constant 0 : index
      %31 = vector.load %arg7[%c0_25, %c0_26] : memref<16x64xf32, #tpu.memory_space<vmem>>, vector<16x64xf32>
      %cst_27 = arith.constant dense<0.000000e+00> : vector<16x64xf32>
      %32 = tpu.matmul %25, %31, %cst_27 {dimension_numbers = #tpu.dot_dimension_numbers<[1], [0], [0], [1], [0, 0, 1, 1], [], []>} : vector<16x16xf32>, vector<16x64xf32>, vector<16x64xf32> -> vector<16x64xf32>
      %c0_28 = arith.constant 0 : index
      %c0_29 = arith.constant 0 : index
      %33 = vector.load %arg8[%c0_28, %c0_29] : memref<16x16xf32, #tpu.memory_space<vmem>>, vector<16x16xf32>
      %34 = tpu.concatenate %33, %33, %33, %33 in 1 : vector<16x16xf32>, vector<16x16xf32>, vector<16x16xf32>, vector<16x16xf32> -> vector<16x64xf32>
      %c0_30 = arith.constant 0 : index
      %c0_31 = arith.constant 0 : index
      %35 = vector.load %arg9[%c0_30, %c0_31] : memref<16x16xf32, #tpu.memory_space<vmem>>, vector<16x16xf32>
      %36 = tpu.concatenate %35, %35, %35, %35 in 1 : vector<16x16xf32>, vector<16x16xf32>, vector<16x16xf32>, vector<16x16xf32> -> vector<16x64xf32>
      %37 = arith.mulf %30, %34 : vector<16x64xf32>
      %38 = arith.mulf %32, %36 : vector<16x64xf32>
      %39 = arith.addf %37, %38 : vector<16x64xf32>
      %c0_32 = arith.constant 0 : index
      %c0_33 = arith.constant 0 : index
      %40 = vector.load %arg11[%c0_32, %c0_33] : memref<16x64xf32, #tpu.memory_space<vmem>>, vector<16x64xf32>
      tpu.vector_store %arg11[%c0_32, %c0_33], %39 {strides = array<i32>} : memref<16x64xf32, #tpu.memory_space<vmem>>, vector<16x64xf32>,
    } else {
    }
    return
  }
  func.func @transform_0(%arg0: i32, %arg1: i32) -> (i32, i32) {
    %c0_i32 = arith.constant 0 : i32
    return %arg0, %arg1 : i32, i32
  }
  func.func @transform_1(%arg0: i32, %arg1: i32) -> (i32, i32) {
    %c0_i32 = arith.constant 0 : i32
    %c0_i32_0 = arith.constant 0 : i32
    return %arg1, %c0_i32 : i32, i32
  }
  func.func @transform_2(%arg0: i32, %arg1: i32) -> (i32, i32) {
    %c0_i32 = arith.constant 0 : i32
    %c0_i32_0 = arith.constant 0 : i32
    %c0_i32_1 = arith.constant 0 : i32
    return %c0_i32, %c0_i32_0 : i32, i32
  }
  func.func @transform_3(%arg0: i32, %arg1: i32) -> (i32, i32) {
    %c0_i32 = arith.constant 0 : i32
    %c0_i32_0 = arith.constant 0 : i32
    %c0_i32_1 = arith.constant 0 : i32
    return %c0_i32, %c0_i32_0 : i32, i32
  }
  func.func @transform_4(%arg0: i32, %arg1: i32) -> (i32, i32) {
    %c0_i32 = arith.constant 0 : i32
    %c0_i32_0 = arith.constant 0 : i32
    %c0_i32_1 = arith.constant 0 : i32
    return %c0_i32, %c0_i32_0 : i32, i32
  }
  func.func @transform_5(%arg0: i32, %arg1: i32) -> (i32, i32) {
    %c0_i32 = arith.constant 0 : i32
    %c0_i32_0 = arith.constant 0 : i32
    %c0_i32_1 = arith.constant 0 : i32
    return %c0_i32, %c0_i32_0 : i32, i32
  }
  func.func @transform_6(%arg0: i32, %arg1: i32) -> (i32, i32) {
    %c0_i32 = arith.constant 0 : i32
    %c0_i32_0 = arith.constant 0 : i32
    return %arg0, %c0_i32 : i32, i32
  }
  func.func @transform_7(%arg0: i32, %arg1: i32) -> (i32, i32) {
    %c0_i32 = arith.constant 0 : i32
    %c0_i32_0 = arith.constant 0 : i32
    return %arg0, %c0_i32 : i32, i32
  }
  func.func @transform_8(%arg0: i32, %arg1: i32) -> (i32, i32) {
    %c0_i32 = arith.constant 0 : i32
    %c0_i32_0 = arith.constant 0 : i32
    return %arg0, %c0_i32 : i32, i32
  }
  func.func @transform_9(%arg0: i32, %arg1: i32) -> (i32, i32) {
    %c0_i32 = arith.constant 0 : i32
    %c0_i32_0 = arith.constant 0 : i32
    return %arg0, %c0_i32 : i32, i32
  }
}

</mosaic_0001>

<llo_original>
// kernel: tpu_custom_call.1
$region0: #{tpu_custom_call.1}
  #allocation0 [shape = 'u32[]', space=smem, size = 0x4, offset = 0x4, fixed_abs, tag = 'smem constant byte address 0x4 - core index']
  #allocation1 [shape = 'u32[144,128]{1,0:T(1,128)}', space=vmem, size = 0x12000, scoped, tag = 'internal scratch']
  #allocation2 [shape = 'f32[16,16]{1,0:T(8,128)}', space=vmem, size = 0x2000, scoped, tag = 'scratch operand']
  %s0 = inlined_call_operand.vmem [shape: f32[16,64], index: 0, kind: input, shape index: {}]
  %s1 = inlined_call_operand.vmem [shape: f32[64,16], index: 1, kind: input, shape index: {}]
  %s2 = inlined_call_operand.vmem [shape: f32[1,16], index: 2, kind: input, shape index: {}]
  %s3 = inlined_call_operand.vmem [shape: f32[16,128], index: 3, kind: input, shape index: {}]
  %s4 = inlined_call_operand.vmem [shape: f32[16,64], index: 4, kind: input, shape index: {}]
  %s5 = inlined_call_operand.vmem [shape: f32[16,64], index: 5, kind: input, shape index: {}]
  %s6 = inlined_call_operand.vmem [shape: f32[16,16], index: 6, kind: input, shape index: {}]
  %s7 = inlined_call_operand.vmem [shape: f32[16,16], index: 7, kind: input, shape index: {}]
  %s8 = inlined_call_operand.hbm [shape: f32[16,128], index: 8, kind: output, shape index: {0}]
  %s9 = inlined_call_operand.hbm [shape: f32[16,64], index: 9, kind: output, shape index: {1}]
  %10 = xla_tuple %s8, %s9
  %s11 = sld [smem:[#allocation0]]
  $region58: #{tpu_custom_call.1} parent=0
    _
  %s13 = ssub.s32 1, %s11
  %s14 = scalar_select 0, %s13, %s11
  $region1: #{tpu_custom_call.1} parent=0
    #allocation3 [shape = 'u8[8192]{0}', space=vmem, size = 0x2000, scoped, tag = 'output window, operand 0, single buffered']
    #allocation4 [shape = 's32[1]{0}', space=sflag, size = 0x4, scoped, tag = 'scoped memory for tpu_custom_call.1']
    #allocation5 [shape = 'u8[8192]{0}', space=vmem, size = 0x2000, scoped, tag = 'output window, operand 1, single buffered']
    #allocation6 [shape = 's32[1]{0}', space=sflag, size = 0x4, scoped, tag = 'scoped memory for tpu_custom_call.1']
    %15 = vsyncpa [#allocation4], 0
    %16 = vsyncpa [#allocation6], 0
    // Predicated region
    $region2: #{tpu_custom_call.1} parent=1 // pred_check
      _
    $region3: #{tpu_custom_call.1} parent=1 // pred_check_branch
      %18 = sbr.rel (0) target = $region5
    $region4: #{tpu_custom_call.1} parent=1 // pred_region
      _
    $region5: #{tpu_custom_call.1} parent=1 // pred_fallthru
      _
    // Predicated region
    $region6: #{tpu_custom_call.1} parent=1 // pred_check
      _
    $region7: #{tpu_custom_call.1} parent=1 // pred_check_branch
      %20 = sbr.rel (0) target = $region9
    $region8: #{tpu_custom_call.1} parent=1 // pred_region
      _
    $region9: #{tpu_custom_call.1} parent=1 // pred_fallthru
      _
    // Predicated region
    $region10: #{tpu_custom_call.1} parent=1 // pred_check
      _
    $region11: #{tpu_custom_call.1} parent=1 // pred_check_branch
      %22 = sbr.rel (0) target = $region13
    $region12: #{tpu_custom_call.1} parent=1 // pred_region
      _
    $region13: #{tpu_custom_call.1} parent=1 // pred_fallthru
      _
    // Predicated region
    $region14: #{tpu_custom_call.1} parent=1 // pred_check
      _
    $region15: #{tpu_custom_call.1} parent=1 // pred_check_branch
      %24 = sbr.rel (0) target = $region17
    $region16: #{tpu_custom_call.1} parent=1 // pred_region
      _
    $region17: #{tpu_custom_call.1} parent=1 // pred_fallthru
      _
    // Predicated region
    $region18: #{tpu_custom_call.1} parent=1 // pred_check
      _
    $region19: #{tpu_custom_call.1} parent=1 // pred_check_branch
      %26 = sbr.rel (0) target = $region21
    $region20: #{tpu_custom_call.1} parent=1 // pred_region
      _
    $region21: #{tpu_custom_call.1} parent=1 // pred_fallthru
      _
    // Predicated region
    $region22: #{tpu_custom_call.1} parent=1 // pred_check
      _
    $region23: #{tpu_custom_call.1} parent=1 // pred_check_branch
      %28 = sbr.rel (0) target = $region25
    $region24: #{tpu_custom_call.1} parent=1 // pred_region
      _
    $region25: #{tpu_custom_call.1} parent=1 // pred_fallthru
      _
    // Predicated region
    $region26: #{tpu_custom_call.1} parent=1 // pred_check
      _
    $region27: #{tpu_custom_call.1} parent=1 // pred_check_branch
      %30 = sbr.rel (0) target = $region29
    $region28: #{tpu_custom_call.1} parent=1 // pred_region
      _
    $region29: #{tpu_custom_call.1} parent=1 // pred_fallthru
      _
    // Predicated region
    $region30: #{tpu_custom_call.1} parent=1 // pred_check
      _
    $region31: #{tpu_custom_call.1} parent=1 // pred_check_branch
      %32 = sbr.rel (0) target = $region33
    $region32: #{tpu_custom_call.1} parent=1 // pred_region
      _
    $region33: #{tpu_custom_call.1} parent=1 // pred_fallthru
      _
    %p33 = scmp.eq.s32.totalorder 0, 0
    // Predicated region
    $region34: #{tpu_custom_call.1} parent=1 // pred_check
      %p34 = pneg %p33
    $region35: #{tpu_custom_call.1} parent=1 // pred_check_branch
      %36 = sbr.rel (%p34) target = $region37
    $region36: #{tpu_custom_call.1} parent=1 // pred_region
      %vm37 = vcmask 130048
      %38 = vst.msk [vmem:[#allocation2] sm:$0xff] %vm37, 0.0
      %39 = vst.msk [vmem:[#allocation2 + $0x8] sm:$0xff] %vm37, 0.0
    $region37: #{tpu_custom_call.1} parent=1 // pred_fallthru
      _
    %v40 = vld [vmem:[#allocation2] sm:$0xff]
    %v41 = vld [vmem:[#allocation2 + $0x8] sm:$0xff]
    %v42 = vld [vmem:[%s0] sm:$0xff]
    %v43 = vld [vmem:[%s0 + $0x8] sm:$0xff]
    %v44 = vld [vmem:[%s1] sm:$0xff]
    %v45 = vld [vmem:[%s1 + $0x8] sm:$0xff]
    %v46 = vld [vmem:[%s1 + $0x10] sm:$0xff]
    %v47 = vld [vmem:[%s1 + $0x18] sm:$0xff]
    %v48 = vld [vmem:[%s1 + $0x20] sm:$0xff]
    %v49 = vld [vmem:[%s1 + $0x28] sm:$0xff]
    %v50 = vld [vmem:[%s1 + $0x30] sm:$0xff]
    %v51 = vld [vmem:[%s1 + $0x38] sm:$0xff]
    %vm52 = vcmask 523264
    %v54 = vsel %vm52, %v42, 0
    %v57 = vsel %vm52, %v43, 0
    %59 = vmatprep.subr.mxu0 0.0
    %60 = vmatpush1.msra.mxu0 %v44
    %61 = vmatprep.subr.mxu0 0.0
    %62 = vmatpush1.msra.mxu0 %v45
    %63 = vmatprep.subr.mxu0 0.0
    %64 = vmatpush1.msra.mxu0 %v46
    %65 = vmatprep.subr.mxu0 0.0
    %66 = vmatpush1.msra.mxu0 %v47
    %67 = vmatprep.subr.mxu0 0.0
    %68 = vmatpush1.msra.mxu0 %v48
    %69 = vmatprep.subr.mxu0 0.0
    %70 = vmatpush1.msra.mxu0 %v49
    %71 = vmatprep.subr.mxu0 0.0
    %72 = vmatpush1.msra.mxu0 %v50
    %73 = vmatprep.subr.mxu0 0.0
    %74 = vmatpush1.msra.mxu0 %v51
    %75 = vmatprep.subr.mxu0 0.0
    %76 = vmatpush1.msra.mxu0 0.0
    %77 = vmatprep.subr.mxu0 0.0
    %78 = vmatpush1.msra.mxu0 0.0
    %79 = vmatprep.subr.mxu0 0.0
    %80 = vmatpush1.msra.mxu0 0.0
    %81 = vmatprep.subr.mxu0 0.0
    %82 = vmatpush1.msra.mxu0 0.0
    %83 = vmatprep.subr.mxu0 0.0
    %84 = vmatpush1.msra.mxu0 0.0
    %85 = vmatprep.subr.mxu0 0.0
    %86 = vmatpush1.msra.mxu0 0.0
    %87 = vmatprep.subr.mxu0 0.0
    %88 = vmatpush1.msra.mxu0 0.0
    %89 = vmatprep.subr.mxu0 0.0
    %90 = vmatpush1.msra.mxu0 0.0
    %91 = vmatprep.subr.mxu0 0.0
    %92 = vmatpush1.msra.mxu0 0.0
    %93 = vmatprep.subr.mxu0 0.0
    %94 = vmatpush1.msra.mxu0 0.0
    %95 = vmatprep.subr.mxu0 0.0
    %96 = vmatpush1.msra.mxu0 0.0
    %97 = vmatprep.subr.mxu0 0.0
    %98 = vmatpush1.msra.mxu0 0.0
    %99 = vmatprep.subr.mxu0 0.0
    %100 = vmatpush1.msra.mxu0 0.0
    %101 = vmatprep.subr.mxu0 0.0
    %102 = vmatpush1.msra.mxu0 0.0
    %103 = vmatprep.subr.mxu0 0.0
    %104 = vmatpush1.msra.mxu0 0.0
    %105 = vmatprep.subr.mxu0 0.0
    %106 = vmatpush1.msra.mxu0 0.0
    %107 = vmatprep.subr.mxu0 0.0
    %108 = vmatpush1.msra.mxu0 0.0
    %109 = vmatprep.subr.mxu0 0.0
    %110 = vmatpush1.msra.mxu0 0.0
    %111 = vmatprep.subr.mxu0 0.0
    %112 = vmatpush1.msra.mxu0 0.0
    %113 = vmatprep.subr.mxu0 0.0
    %114 = vmatpush1.msra.mxu0 0.0
    %115 = vmatprep.subr.mxu0 0.0
    %116 = vmatpush1.msra.mxu0 0.0
    %117 = vmatprep.subr.mxu0 0.0
    %118 = vmatpush1.msra.mxu0 0.0
    %119 = vmatprep.subr.mxu0 0.0
    %120 = vmatpush1.msra.mxu0 0.0
    %121 = vmatprep.subr.mxu0 0.0
    %122 = vmatpush1.msra.mxu0 0.0
    %123 = vmatprep.mubr.f32.mxu0 0.0
    %124 = vmatmul.mubr.f32.gmra.mrb[0].mxu0 %v54
    %v125 = vpop.f32.mrb[0].mxu0
    %v126 = vadd.f32 0.0, %v125
    %v127 = vpop.f32.mrb[0].mxu0
    %128 = vmatprep.mubr.f32.mxu0 0.0
    %129 = vmatmul.mubr.f32.gmra.mrb[0].mxu0 %v57
    %v130 = vpop.f32.mrb[0].mxu0
    %v131 = vadd.f32 0.0, %v130
    %v132 = vpop.f32.mrb[0].mxu0
    %133 = vdwg.mxu0
    %v134 = vadd.f32 %v40, %v126
    %v135 = vadd.f32 %v41, %v131
    %vm136 = vcmask 130048
    %137 = vst.msk [vmem:[#allocation2] sm:$0xff] %vm136, %v134
    %138 = vst.msk [vmem:[#allocation2 + $0x8] sm:$0xff] %vm136, %v135
    // Predicated region
    $region38: #{tpu_custom_call.1} parent=1 // pred_check
      %p139 = pneg %p33
    $region39: #{tpu_custom_call.1} parent=1 // pred_check_branch
      %141 = sbr.rel (%p139) target = $region41
    $region40: #{tpu_custom_call.1} parent=1 // pred_region
      %v142 = vld [vmem:[#allocation2] sm:$0xff]
      %v143 = vld [vmem:[#allocation2 + $0x8] sm:$0xff]
      %v144 = vmul.f32 %v142, %v142
      %v145 = vmul.f32 %v143, %v143
      %v146 = vsel %vm136, %v144, 0.0
      %147 = vadd.xlane.f32.xlu0 %v146
      %v148 = vpop.xlane.xlu0 %147
      %v149 = vsel %vm136, %v145, 0.0
      %150 = vadd.xlane.f32.xlu0 %v149
      %v151 = vpop.xlane.xlu0 %150
      %v152 = vrcp.pop 16.0
      %v153 = vmul.f32 %v148, %v152
      %v154 = vmul.f32 %v151, %v152
      %v155 = vadd.f32 %v153, 1e-07
      %v156 = vadd.f32 %v154, 1e-07
      %v157 = vrsqrt.pop %v155
      %v158 = vrsqrt.pop %v156
      %v159 = vmul.f32 %v142, %v157
      %v160 = vmul.f32 %v143, %v158
      %v161 = vld [vmem:[%s2] sm:$0x1]
      %v163 = vlaneseq
      %v164 = vshrl.u32 %v163, 7
      %v165 = vsub.s32 0, %v164
      %v166 = vrot.slane %v161, %v165
      %v168 = vmul.f32 %v159, %v166
      %v169 = vmul.f32 %v160, %v166
      %v170 = vld [vmem:[%s3] sm:$0xff]
      %v171 = vld [vmem:[%s3 + $0x8] sm:$0xff]
      %v173 = vsel %vm136, %v168, 0
      %v176 = vsel %vm136, %v169, 0
      %178 = vmatprep.subr.mxu0 0.0
      %179 = vmatpush1.msra.mxu0 %v170
      %180 = vmatprep.subr.mxu0 0.0
      %181 = vmatpush1.msra.mxu0 %v171
      %182 = vmatprep.subr.mxu0 0.0
      %183 = vmatpush1.msra.mxu0 0.0
      %184 = vmatprep.subr.mxu0 0.0
      %185 = vmatpush1.msra.mxu0 0.0
      %186 = vmatprep.subr.mxu0 0.0
      %187 = vmatpush1.msra.mxu0 0.0
      %188 = vmatprep.subr.mxu0 0.0
      %189 = vmatpush1.msra.mxu0 0.0
      %190 = vmatprep.subr.mxu0 0.0
      %191 = vmatpush1.msra.mxu0 0.0
      %192 = vmatprep.subr.mxu0 0.0
      %193 = vmatpush1.msra.mxu0 0.0
      %194 = vmatprep.subr.mxu0 0.0
      %195 = vmatpush1.msra.mxu0 0.0
      %196 = vmatprep.subr.mxu0 0.0
      %197 = vmatpush1.msra.mxu0 0.0
      %198 = vmatprep.subr.mxu0 0.0
      %199 = vmatpush1.msra.mxu0 0.0
      %200 = vmatprep.subr.mxu0 0.0
      %201 = vmatpush1.msra.mxu0 0.0
      %202 = vmatprep.subr.mxu0 0.0
      %203 = vmatpush1.msra.mxu0 0.0
      %204 = vmatprep.subr.mxu0 0.0
      %205 = vmatpush1.msra.mxu0 0.0
      %206 = vmatprep.subr.mxu0 0.0
      %207 = vmatpush1.msra.mxu0 0.0
      %208 = vmatprep.subr.mxu0 0.0
      %209 = vmatpush1.msra.mxu0 0.0
      %210 = vmatprep.subr.mxu0 0.0
      %211 = vmatpush1.msra.mxu0 0.0
      %212 = vmatprep.subr.mxu0 0.0
      %213 = vmatpush1.msra.mxu0 0.0
      %214 = vmatprep.subr.mxu0 0.0
      %215 = vmatpush1.msra.mxu0 0.0
      %216 = vmatprep.subr.mxu0 0.0
      %217 = vmatpush1.msra.mxu0 0.0
      %218 = vmatprep.subr.mxu0 0.0
      %219 = vmatpush1.msra.mxu0 0.0
      %220 = vmatprep.subr.mxu0 0.0
      %221 = vmatpush1.msra.mxu0 0.0
      %222 = vmatprep.subr.mxu0 0.0
      %223 = vmatpush1.msra.mxu0 0.0
      %224 = vmatprep.subr.mxu0 0.0
      %225 = vmatpush1.msra.mxu0 0.0
      %226 = vmatprep.subr.mxu0 0.0
      %227 = vmatpush1.msra.mxu0 0.0
      %228 = vmatprep.subr.mxu0 0.0
      %229 = vmatpush1.msra.mxu0 0.0
      %230 = vmatprep.subr.mxu0 0.0
      %231 = vmatpush1.msra.mxu0 0.0
      %232 = vmatprep.subr.mxu0 0.0
      %233 = vmatpush1.msra.mxu0 0.0
      %234 = vmatprep.subr.mxu0 0.0
      %235 = vmatpush1.msra.mxu0 0.0
      %236 = vmatprep.subr.mxu0 0.0
      %237 = vmatpush1.msra.mxu0 0.0
      %238 = vmatprep.subr.mxu0 0.0
      %239 = vmatpush1.msra.mxu0 0.0
      %240 = vmatprep.subr.mxu0 0.0
      %241 = vmatpush1.msra.mxu0 0.0
      %242 = vmatprep.mubr.f32.mxu0 0.0
      %243 = vmatmul.mubr.f32.gmra.mrb[0].mxu0 %v173
      %v244 = vpop.f32.mrb[0].mxu0
      %v245 = vadd.f32 0.0, %v244
      %v246 = vpop.f32.mrb[0].mxu0
      %247 = vmatprep.mubr.f32.mxu0 0.0
      %248 = vmatmul.mubr.f32.gmra.mrb[0].mxu0 %v176
      %v249 = vpop.f32.mrb[0].mxu0
      %v250 = vadd.f32 0.0, %v249
      %v251 = vpop.f32.mrb[0].mxu0
      %252 = vdwg.mxu0
      %253 = vst [vmem:[#allocation3] sm:$0xff] %v245
      %254 = vst [vmem:[#allocation3 + $0x8] sm:$0xff] %v250
      %v255 = vld [vmem:[%s4] sm:$0xff]
      %v256 = vld [vmem:[%s4 + $0x8] sm:$0xff]
      %257 = vmatprep.subr.mxu0 0.0
      %258 = vmatpush1.msra.mxu0 %v255
      %259 = vmatprep.subr.mxu0 0.0
      %260 = vmatpush1.msra.mxu0 %v256
      %261 = vmatprep.subr.mxu0 0.0
      %262 = vmatpush1.msra.mxu0 0.0
      %263 = vmatprep.subr.mxu0 0.0
      %264 = vmatpush1.msra.mxu0 0.0
      %265 = vmatprep.subr.mxu0 0.0
      %266 = vmatpush1.msra.mxu0 0.0
      %267 = vmatprep.subr.mxu0 0.0
      %268 = vmatpush1.msra.mxu0 0.0
      %269 = vmatprep.subr.mxu0 0.0
      %270 = vmatpush1.msra.mxu0 0.0
      %271 = vmatprep.subr.mxu0 0.0
      %272 = vmatpush1.msra.mxu0 0.0
      %273 = vmatprep.subr.mxu0 0.0
      %274 = vmatpush1.msra.mxu0 0.0
      %275 = vmatprep.subr.mxu0 0.0
      %276 = vmatpush1.msra.mxu0 0.0
      %277 = vmatprep.subr.mxu0 0.0
      %278 = vmatpush1.msra.mxu0 0.0
      %279 = vmatprep.subr.mxu0 0.0
      %280 = vmatpush1.msra.mxu0 0.0
      %281 = vmatprep.subr.mxu0 0.0
      %282 = vmatpush1.msra.mxu0 0.0
      %283 = vmatprep.subr.mxu0 0.0
      %284 = vmatpush1.msra.mxu0 0.0
      %285 = vmatprep.subr.mxu0 0.0
      %286 = vmatpush1.msra.mxu0 0.0
      %287 = vmatprep.subr.mxu0 0.0
      %288 = vmatpush1.msra.mxu0 0.0
      %289 = vmatprep.subr.mxu0 0.0
      %290 = vmatpush1.msra.mxu0 0.0
      %291 = vmatprep.subr.mxu0 0.0
      %292 = vmatpush1.msra.mxu0 0.0
      %293 = vmatprep.subr.mxu0 0.0
      %294 = vmatpush1.msra.mxu0 0.0
      %295 = vmatprep.subr.mxu0 0.0
      %296 = vmatpush1.msra.mxu0 0.0
      %297 = vmatprep.subr.mxu0 0.0
      %298 = vmatpush1.msra.mxu0 0.0
      %299 = vmatprep.subr.mxu0 0.0
      %300 = vmatpush1.msra.mxu0 0.0
      %301 = vmatprep.subr.mxu0 0.0
      %302 = vmatpush1.msra.mxu0 0.0
      %303 = vmatprep.subr.mxu0 0.0
      %304 = vmatpush1.msra.mxu0 0.0
      %305 = vmatprep.subr.mxu0 0.0
      %306 = vmatpush1.msra.mxu0 0.0
      %307 = vmatprep.subr.mxu0 0.0
      %308 = vmatpush1.msra.mxu0 0.0
      %309 = vmatprep.subr.mxu0 0.0
      %310 = vmatpush1.msra.mxu0 0.0
      %311 = vmatprep.subr.mxu0 0.0
      %312 = vmatpush1.msra.mxu0 0.0
      %313 = vmatprep.subr.mxu0 0.0
      %314 = vmatpush1.msra.mxu0 0.0
      %315 = vmatprep.subr.mxu0 0.0
      %316 = vmatpush1.msra.mxu0 0.0
      %317 = vmatprep.subr.mxu0 0.0
      %318 = vmatpush1.msra.mxu0 0.0
      %319 = vmatprep.subr.mxu0 0.0
      %320 = vmatpush1.msra.mxu0 0.0
      %321 = vmatprep.mubr.f32.mxu0 0.0
      %322 = vmatmul.mubr.f32.gmra.mrb[0].mxu0 %v173
      %v323 = vpop.f32.mrb[0].mxu0
      %v324 = vadd.f32 0.0, %v323
      %v325 = vpop.f32.mrb[0].mxu0
      %326 = vmatprep.mubr.f32.mxu0 0.0
      %327 = vmatmul.mubr.f32.gmra.mrb[0].mxu0 %v176
      %v328 = vpop.f32.mrb[0].mxu0
      %v329 = vadd.f32 0.0, %v328
      %v330 = vpop.f32.mrb[0].mxu0
      %331 = vdwg.mxu0
      %v332 = vld [vmem:[%s5] sm:$0xff]
      %v333 = vld [vmem:[%s5 + $0x8] sm:$0xff]
      %334 = vmatprep.subr.mxu0 0.0
      %335 = vmatpush1.msra.mxu0 %v332
      %336 = vmatprep.subr.mxu0 0.0
      %337 = vmatpush1.msra.mxu0 %v333
      %338 = vmatprep.subr.mxu0 0.0
      %339 = vmatpush1.msra.mxu0 0.0
      %340 = vmatprep.subr.mxu0 0.0
      %341 = vmatpush1.msra.mxu0 0.0
      %342 = vmatprep.subr.mxu0 0.0
      %343 = vmatpush1.msra.mxu0 0.0
      %344 = vmatprep.subr.mxu0 0.0
      %345 = vmatpush1.msra.mxu0 0.0
      %346 = vmatprep.subr.mxu0 0.0
      %347 = vmatpush1.msra.mxu0 0.0
      %348 = vmatprep.subr.mxu0 0.0
      %349 = vmatpush1.msra.mxu0 0.0
      %350 = vmatprep.subr.mxu0 0.0
      %351 = vmatpush1.msra.mxu0 0.0
      %352 = vmatprep.subr.mxu0 0.0
      %353 = vmatpush1.msra.mxu0 0.0
      %354 = vmatprep.subr.mxu0 0.0
      %355 = vmatpush1.msra.mxu0 0.0
      %356 = vmatprep.subr.mxu0 0.0
      %357 = vmatpush1.msra.mxu0 0.0
      %358 = vmatprep.subr.mxu0 0.0
      %359 = vmatpush1.msra.mxu0 0.0
      %360 = vmatprep.subr.mxu0 0.0
      %361 = vmatpush1.msra.mxu0 0.0
      %362 = vmatprep.subr.mxu0 0.0
      %363 = vmatpush1.msra.mxu0 0.0
      %364 = vmatprep.subr.mxu0 0.0
      %365 = vmatpush1.msra.mxu0 0.0
      %366 = vmatprep.subr.mxu0 0.0
      %367 = vmatpush1.msra.mxu0 0.0
      %368 = vmatprep.subr.mxu0 0.0
      %369 = vmatpush1.msra.mxu0 0.0
      %370 = vmatprep.subr.mxu0 0.0
      %371 = vmatpush1.msra.mxu0 0.0
      %372 = vmatprep.subr.mxu0 0.0
      %373 = vmatpush1.msra.mxu0 0.0
      %374 = vmatprep.subr.mxu0 0.0
      %375 = vmatpush1.msra.mxu0 0.0
      %376 = vmatprep.subr.mxu0 0.0
      %377 = vmatpush1.msra.mxu0 0.0
      %378 = vmatprep.subr.mxu0 0.0
      %379 = vmatpush1.msra.mxu0 0.0
      %380 = vmatprep.subr.mxu0 0.0
      %381 = vmatpush1.msra.mxu0 0.0
      %382 = vmatprep.subr.mxu0 0.0
      %383 = vmatpush1.msra.mxu0 0.0
      %384 = vmatprep.subr.mxu0 0.0
      %385 = vmatpush1.msra.mxu0 0.0
      %386 = vmatprep.subr.mxu0 0.0
      %387 = vmatpush1.msra.mxu0 0.0
      %388 = vmatprep.subr.mxu0 0.0
      %389 = vmatpush1.msra.mxu0 0.0
      %390 = vmatprep.subr.mxu0 0.0
      %391 = vmatpush1.msra.mxu0 0.0
      %392 = vmatprep.subr.mxu0 0.0
      %393 = vmatpush1.msra.mxu0 0.0
      %394 = vmatprep.subr.mxu0 0.0
      %395 = vmatpush1.msra.mxu0 0.0
      %396 = vmatprep.subr.mxu0 0.0
      %397 = vmatpush1.msra.mxu0 0.0
      %398 = vmatprep.mubr.f32.mxu0 0.0
      %399 = vmatmul.mubr.f32.gmra.mrb[0].mxu0 %v173
      %v400 = vpop.f32.mrb[0].mxu0
      %v401 = vadd.f32 0.0, %v400
      %v402 = vpop.f32.mrb[0].mxu0
      %403 = vmatprep.mubr.f32.mxu0 0.0
      %404 = vmatmul.mubr.f32.gmra.mrb[0].mxu0 %v176
      %v405 = vpop.f32.mrb[0].mxu0
      %v406 = vadd.f32 0.0, %v405
      %v407 = vpop.f32.mrb[0].mxu0
      %408 = vdwg.mxu0
      %v409 = vld [vmem:[%s6] sm:$0xff]
      %v410 = vld [vmem:[%s6 + $0x8] sm:$0xff]
      %413 = vrot.lane.b32.xlu0 %v409, 16
      %v414 = vpop.permute.xlu0 %413
      %415 = vrot.lane.b32.xlu0 %v410, 16
      %v416 = vpop.permute.xlu0 %415
      %419 = vrot.lane.b32.xlu0 %v409, 32
      %v420 = vpop.permute.xlu0 %419
      %421 = vrot.lane.b32.xlu0 %v410, 32
      %v422 = vpop.permute.xlu0 %421
      %425 = vrot.lane.b32.xlu0 %v409, 48
      %v426 = vpop.permute.xlu0 %425
      %427 = vrot.lane.b32.xlu0 %v410, 48
      %v428 = vpop.permute.xlu0 %427
      %v431 = vsel %vm136, %v409, %v414
      %v432 = vsel %vm136, %v410, %v416
      %vm433 = vcmask 261120
      %v434 = vsel %vm433, %v431, %v420
      %v435 = vsel %vm433, %v432, %v422
      %vm436 = vcmask 392192
      %v437 = vsel %vm436, %v434, %v426
      %v438 = vsel %vm436, %v435, %v428
      %v439 = vld [vmem:[%s7] sm:$0xff]
      %v440 = vld [vmem:[%s7 + $0x8] sm:$0xff]
      %443 = vrot.lane.b32.xlu0 %v439, 16
      %v444 = vpop.permute.xlu0 %443
      %445 = vrot.lane.b32.xlu0 %v440, 16
      %v446 = vpop.permute.xlu0 %445
      %449 = vrot.lane.b32.xlu0 %v439, 32
      %v450 = vpop.permute.xlu0 %449
      %451 = vrot.lane.b32.xlu0 %v440, 32
      %v452 = vpop.permute.xlu0 %451
      %455 = vrot.lane.b32.xlu0 %v439, 48
      %v456 = vpop.permute.xlu0 %455
      %457 = vrot.lane.b32.xlu0 %v440, 48
      %v458 = vpop.permute.xlu0 %457
      %v461 = vsel %vm136, %v439, %v444
      %v462 = vsel %vm136, %v440, %v446
      %v463 = vsel %vm433, %v461, %v450
      %v464 = vsel %vm433, %v462, %v452
      %v465 = vsel %vm436, %v463, %v456
      %v466 = vsel %vm436, %v464, %v458
      %v467 = vmul.f32 %v324, %v437
      %v468 = vmul.f32 %v329, %v438
      %v469 = vmul.f32 %v401, %v465
      %v470 = vmul.f32 %v406, %v466
      %v471 = vadd.f32 %v467, %v469
      %v472 = vadd.f32 %v468, %v470
      %473 = vst.msk [vmem:[#allocation5] sm:$0xff] %vm52, %v471
      %474 = vst.msk [vmem:[#allocation5 + $0x8] sm:$0xff] %vm52, %v472
    $region41: #{tpu_custom_call.1} parent=1 // pred_fallthru
      _
    // Predicated region
    $region42: #{tpu_custom_call.1} parent=1 // pred_check
      _
    $region43: #{tpu_custom_call.1} parent=1 // pred_check_branch
      %476 = sbr.rel (0) target = $region45
    $region44: #{tpu_custom_call.1} parent=1 // pred_region
      %s478 = ssub.s32 256, 256
      %479 = vsyncadd [#allocation4], %s478
      %s480 = sshll.u32 [#allocation3], 4
      %s481 = int_to_ptr.vmem [resolvable:$true] %s480
      %486 = dma.vmem_to_hbm [thread:$0]  %s481, 256, %s8, [#allocation4], 128, 128, 8
    $region45: #{tpu_custom_call.1} parent=1 // pred_fallthru
      _
    // Predicated region
    $region46: #{tpu_custom_call.1} parent=1 // pred_check
      _
    $region47: #{tpu_custom_call.1} parent=1 // pred_check_branch
      %488 = sbr.rel (0) target = $region49
    $region48: #{tpu_custom_call.1} parent=1 // pred_region
      %s490 = ssub.s32 256, 256
      %491 = vsyncadd [#allocation6], %s490
      %s492 = sshll.u32 [#allocation5], 4
      %s493 = int_to_ptr.vmem [resolvable:$true] %s492
      %498 = dma.vmem_to_hbm [thread:$0]  %s493, 256, %s9, [#allocation6], 128, 128, 8
    $region49: #{tpu_custom_call.1} parent=1 // pred_fallthru
      _
    // Predicated region
    $region50: #{tpu_custom_call.1} parent=1 // pred_check
      _
    $region51: #{tpu_custom_call.1} parent=1 // pred_check_branch
      %500 = sbr.rel (0) target = $region53
    $region52: #{tpu_custom_call.1} parent=1 // pred_region
      %501 = dma.done [#allocation4], 256
    $region53: #{tpu_custom_call.1} parent=1 // pred_fallthru
      _
    // Predicated region
    $region54: #{tpu_custom_call.1} parent=1 // pred_check
      _
    $region55: #{tpu_custom_call.1} parent=1 // pred_check_branch
      %503 = sbr.rel (0) target = $region57
    $region56: #{tpu_custom_call.1} parent=1 // pred_region
      %504 = dma.done [#allocation6], 256
    $region57: #{tpu_custom_call.1} parent=1 // pred_fallthru
      _
    %505 = vsyncpa [#allocation4], 1
    %506 = vsyncpa [#allocation6], 1

</llo_original>
